<compile_context>
chip_gen: v5e
topology: v5e:2x2
jax: 0.10.0
libtpu: 0.0.40
codegen_flags: <defaults>
</compile_context>

<pallas_src>
import numpy as np
import jax
import jax.numpy as jnp
from jax.experimental import pallas as pl
from jax.experimental.pallas import tpu as pltpu


# ----------------------------------------------------------------------------
# Pallas kernel: one batch element per grid step.
# ----------------------------------------------------------------------------
def _ca_kernel(x_ref, w1_ref, w2_ref, o_ref):
    x = x_ref[0]                                             # (C, HW) f32
    hw = x.shape[1]

    # Global average pool over the spatial (lane) axis -> per-channel column.
    pooled = jnp.sum(x, axis=1, keepdims=True) * (1.0 / float(hw))     # (C, 1)

    # conv_du: Conv1x1 (C -> C//r) -> ReLU -> Conv1x1 (C//r -> C) -> Sigmoid.
    h = jnp.dot(w1_ref[...], pooled, preferred_element_type=jnp.float32)  # (Cr, 1)
    h = jnp.maximum(h, 0.0)
    y = jnp.dot(w2_ref[...], h, preferred_element_type=jnp.float32)       # (C, 1)
    y = 1.0 / (1.0 + jnp.exp(-y))                            # sigmoid (EUP exp)

    # Per-channel re-scale, broadcast over the spatial (lane) axis; store is
    # lane-dense since HW is a multiple of 128.
    o_ref[0] = (x * y).astype(o_ref.dtype)


# ----------------------------------------------------------------------------
# Wrapper: NCHW in, NCHW out.  Only free reshapes outside the kernel.
# ----------------------------------------------------------------------------
def ca_layer_forward(x_nchw, w1, w2):
    """x_nchw: (N, C, H, W) f32.  w1: (Cr, C), w2: (C, Cr)  (squeezed OIHW)."""
    N, C, H, W = x_nchw.shape
    Cr = w1.shape[0]
    HW = H * W

    x_flat = x_nchw.reshape(N, C, HW)                        # contiguous, free

    cost = pl.CostEstimate(
        flops=N * (2 * HW * C + 4 * C * Cr),
        transcendentals=N * C,
        bytes_accessed=(2 * N * HW * C + 2 * C * Cr) * 4,
    )

    out_flat = pl.pallas_call(
        _ca_kernel,
        out_shape=jax.ShapeDtypeStruct((N, C, HW), jnp.float32),
        grid=(N,),
        in_specs=[
            pl.BlockSpec((1, C, HW), lambda b: (b, 0, 0)),   # x (per batch element)
            pl.BlockSpec((Cr, C), lambda b: (0, 0)),         # w1 (grid-invariant)
            pl.BlockSpec((C, Cr), lambda b: (0, 0)),         # w2 (grid-invariant)
        ],
        out_specs=pl.BlockSpec((1, C, HW), lambda b: (b, 0, 0)),
        compiler_params=pltpu.CompilerParams(
            dimension_semantics=("parallel",),               # batch across TCs (v7x)
        ),
        cost_estimate=cost,
    )(x_flat, w1, w2)

    return out_flat.reshape(N, C, H, W)                      # free reshape


# ----------------------------------------------------------------------------
# Deterministic parameter init (PyTorch OIHW conv weights, bias=False) + convert
# ----------------------------------------------------------------------------
def init_params(key, channel, reduction=16):
    cr = channel // reduction
    k1, k2 = jax.random.split(key)
    return dict(
        w1_oihw=jax.random.normal(k1, (cr, channel, 1, 1), jnp.float32) * 0.2,
        w2_oihw=jax.random.normal(k2, (channel, cr, 1, 1), jnp.float32) * 0.2,
    )


def to_kernel_params(p):
    # OIHW (out, in, 1, 1) -> squeezed (out, in): used as left matmul operands.
    w1 = p["w1_oihw"][:, :, 0, 0]                            # (Cr, C)
    w2 = p["w2_oihw"][:, :, 0, 0]                            # (C, Cr)
    return w1, w2


# ----------------------------------------------------------------------------
# Pure-JAX reference (matches the PyTorch module semantics), for verification
# ----------------------------------------------------------------------------
def reference_forward(x, p):
    dn = ("NCHW", "OIHW", "NCHW")
    y = jnp.mean(x, axis=(2, 3), keepdims=True)              # AdaptiveAvgPool2d(1)
    y = jax.lax.conv_general_dilated(y, p["w1_oihw"], (1, 1), "VALID",
                                     dimension_numbers=dn)
    y = jax.nn.relu(y)
    y = jax.lax.conv_general_dilated(y, p["w2_oihw"], (1, 1), "VALID",
                                     dimension_numbers=dn)
    y = jax.nn.sigmoid(y)
    return x * y


# ----------------------------------------------------------------------------
if __name__ == "__main__":
    # C = 128 (typical CALayer width) keeps the sublane axis aligned and
    # C // reduction = 8 non-degenerate with the default reduction=16.
    # H = W = 16 -> HW = 256, a multiple of 128 (lane-dense slab).
    N, C, H, W = 2, 128, 16, 16
    reduction = 16

    key = jax.random.PRNGKey(0)
    key_x, key_p = jax.random.split(key)
    x = jax.random.normal(key_x, (N, C, H, W), jnp.float32)

    params = init_params(key_p, C, reduction)
    w1, w2 = to_kernel_params(params)

    out = jax.block_until_ready(ca_layer_forward(x, w1, w2))
    ref = jax.block_until_ready(reference_forward(x, params))

    assert out.shape == (N, C, H, W), out.shape
    if not np.allclose(np.asarray(out), np.asarray(ref), atol=2e-2, rtol=2e-2):
        max_err = float(np.max(np.abs(np.asarray(out) - np.asarray(ref))))
        raise AssertionError(f"Pallas kernel mismatch vs reference, max_err={max_err}")

    print("KERNEL_OK")
</pallas_src>

<mosaic_0001>
module attributes {stable_mosaic.version = 11 : i64} {
  func.func @_ca_kernel(%arg0: i32, %arg1: memref<1x128x256xf32, #tpu.memory_space<vmem>>, %arg2: memref<8x128xf32, #tpu.memory_space<vmem>>, %arg3: memref<128x8xf32, #tpu.memory_space<vmem>>, %arg4: memref<1x128x256xf32, #tpu.memory_space<vmem>>) attributes {dimension_semantics = [#tpu.dimension_semantics<parallel>], iteration_bounds = array<i64: 2>, scalar_prefetch = 0 : i64, scratch_operands = 0 : i64, tpu.core_type = #tpu.core_type<tc>, window_params = [{transform_indices = @transform_0, window_bounds = array<i64: 1, 128, 256>}, {pipeline_mode = #tpu.pipeline_mode<synchronous>, transform_indices = @transform_1, window_bounds = array<i64: 8, 128>}, {pipeline_mode = #tpu.pipeline_mode<synchronous>, transform_indices = @transform_2, window_bounds = array<i64: 128, 8>}, {transform_indices = @transform_3, window_bounds = array<i64: 1, 128, 256>}]} {
    %c0 = arith.constant 0 : index
    %c0_0 = arith.constant 0 : index
    %c0_1 = arith.constant 0 : index
    %0 = vector.load %arg1[%c0, %c0_0, %c0_1] : memref<1x128x256xf32, #tpu.memory_space<vmem>>, vector<1x128x256xf32>
    %1 = vector.shape_cast %0 : vector<1x128x256xf32> to vector<128x256xf32>
    %cst = arith.constant dense<0.000000e+00> : vector<128xf32>
    %2 = vector.multi_reduction <add>, %1, %cst [1] : vector<128x256xf32> to vector<128xf32>
    %3 = vector.shape_cast %2 : vector<128xf32> to vector<128x1xf32>
    %cst_2 = arith.constant 3.906250e-03 : f32
    %4 = vector.broadcast %cst_2 : f32 to vector<128x1xf32>
    %5 = arith.mulf %3, %4 : vector<128x1xf32>
    %c0_3 = arith.constant 0 : index
    %c0_4 = arith.constant 0 : index
    %6 = vector.load %arg2[%c0_3, %c0_4] : memref<8x128xf32, #tpu.memory_space<vmem>>, vector<8x128xf32>
    %cst_5 = arith.constant dense<0.000000e+00> : vector<8x1xf32>
    %7 = tpu.matmul %6, %5, %cst_5 {dimension_numbers = #tpu.dot_dimension_numbers<[1], [0], [0], [1], [0, 0, 1, 1], [], []>} : vector<8x128xf32>, vector<128x1xf32>, vector<8x1xf32> -> vector<8x1xf32>
    %cst_6 = arith.constant 0.000000e+00 : f32
    %8 = vector.broadcast %cst_6 : f32 to vector<8x1xf32>
    %9 = arith.maximumf %7, %8 : vector<8x1xf32>
    %c0_7 = arith.constant 0 : index
    %c0_8 = arith.constant 0 : index
    %10 = vector.load %arg3[%c0_7, %c0_8] : memref<128x8xf32, #tpu.memory_space<vmem>>, vector<128x8xf32>
    %cst_9 = arith.constant dense<0.000000e+00> : vector<128x1xf32>
    %11 = tpu.matmul %10, %9, %cst_9 {dimension_numbers = #tpu.dot_dimension_numbers<[1], [0], [0], [1], [0, 0, 1, 1], [], []>} : vector<128x8xf32>, vector<8x1xf32>, vector<128x1xf32> -> vector<128x1xf32>
    %cst_10 = arith.constant 0.000000e+00 : f32
    %12 = vector.broadcast %cst_10 : f32 to vector<128x1xf32>
    %13 = arith.subf %12, %11 : vector<128x1xf32>
    %14 = math.exp %13 : vector<128x1xf32>
    %cst_11 = arith.constant 1.000000e+00 : f32
    %15 = vector.broadcast %cst_11 : f32 to vector<128x1xf32>
    %16 = arith.addf %15, %14 : vector<128x1xf32>
    %cst_12 = arith.constant 1.000000e+00 : f32
    %17 = vector.broadcast %cst_12 : f32 to vector<128x1xf32>
    %18 = arith.divf %17, %16 : vector<128x1xf32>
    %19 = vector.broadcast %18 : vector<128x1xf32> to vector<128x256xf32>
    %20 = arith.mulf %1, %19 : vector<128x256xf32>
    %c0_13 = arith.constant 0 : index
    %c0_14 = arith.constant 0 : index
    %c0_15 = arith.constant 0 : index
    %21 = vector.load %arg4[%c0_13, %c0_14, %c0_15] : memref<1x128x256xf32, #tpu.memory_space<vmem>>, vector<1x128x256xf32>
    %22 = vector.shape_cast %21 : vector<1x128x256xf32> to vector<128x256xf32>
    %23 = vector.shape_cast %20 : vector<128x256xf32> to vector<1x128x256xf32>
    tpu.vector_store %arg4[%c0_13, %c0_14, %c0_15], %23 {strides = array<i32>} : memref<1x128x256xf32, #tpu.memory_space<vmem>>, vector<1x128x256xf32>,
    return
  }
  func.func @transform_0(%arg0: i32) -> (i32, i32, i32) {
    %c0_i32 = arith.constant 0 : i32
    %c0_i32_0 = arith.constant 0 : i32
    %c0_i32_1 = arith.constant 0 : i32
    return %arg0, %c0_i32, %c0_i32_0 : i32, i32, i32
  }
  func.func @transform_1(%arg0: i32) -> (i32, i32) {
    %c0_i32 = arith.constant 0 : i32
    %c0_i32_0 = arith.constant 0 : i32
    %c0_i32_1 = arith.constant 0 : i32
    return %c0_i32, %c0_i32_0 : i32, i32
  }
  func.func @transform_2(%arg0: i32) -> (i32, i32) {
    %c0_i32 = arith.constant 0 : i32
    %c0_i32_0 = arith.constant 0 : i32
    %c0_i32_1 = arith.constant 0 : i32
    return %c0_i32, %c0_i32_0 : i32, i32
  }
  func.func @transform_3(%arg0: i32) -> (i32, i32, i32) {
    %c0_i32 = arith.constant 0 : i32
    %c0_i32_0 = arith.constant 0 : i32
    %c0_i32_1 = arith.constant 0 : i32
    return %arg0, %c0_i32, %c0_i32_0 : i32, i32, i32
  }
}

</mosaic_0001>

<llo_original>
// kernel: tpu_custom_call.1
$region0: #{tpu_custom_call.1}
  #allocation0 [shape = 'u32[]', space=smem, size = 0x4, offset = 0x4, fixed_abs, tag = 'smem constant byte address 0x4 - core index']
  #allocation1 [shape = 'u32[72,128]{1,0:T(1,128)}', space=vmem, size = 0x9000, scoped, tag = 'internal scratch']
  %s0 = inlined_call_operand.hbm [shape: f32[2,128,256], index: 0, kind: input, shape index: {}]
  %s1 = inlined_call_operand.vmem [shape: f32[8,128], index: 1, kind: input, shape index: {}]
  %s2 = inlined_call_operand.vmem [shape: f32[128,8], index: 2, kind: input, shape index: {}]
  %s3 = inlined_call_operand.hbm [shape: f32[2,128,256], index: 3, kind: output, shape index: {}]
  %s4 = sld [smem:[#allocation0]]
  $region49: #{tpu_custom_call.1} parent=0
    _
  %s6 = ssub.s32 1, %s4
  %s7 = scalar_select 0, %s6, %s4
  $region1: #{tpu_custom_call.1} parent=0
    #allocation2 [shape = 'u8[262144]{0}', space=vmem, size = 0x40000, scoped, tag = 'input window, operand 0']
    #allocation3 [shape = 's32[2]{0}', space=sflag, size = 0x8, scoped, tag = 'scoped memory for tpu_custom_call.1']
    #allocation4 [shape = 's32[2]{0}', space=sflag, size = 0x8, scoped, tag = 'scoped memory for tpu_custom_call.1']
    #allocation5 [shape = 'u8[262144]{0}', space=vmem, size = 0x40000, scoped, tag = 'output window, operand 0']
    %8 = vsyncpa [#allocation3], 0
    %s9 = scalar_lea.sflag [#allocation3], 1
    %10 = vsyncpa %s9, 0
    %11 = vsyncpa [#allocation4], 0
    %s12 = scalar_lea.sflag [#allocation4], 1
    %13 = vsyncpa %s12, 0
    loop: start=0, step=1, limit=4
    $region2: #{tpu_custom_call.1} parent=1 // loop_pre_header
      _
    $region3: #{tpu_custom_call.1} parent=1 // loop_header
      %s15 = sphi 0, %s19
      %p16 = scmp.ge.s32.totalorder %s15, 4
      %s25 = sphi 0, %s27
      %s28 = sphi 0, %s25
      %s29 = sphi 0, %s28
      %s45 = sphi 0, %s29
      %s49 = sphi 0, %s49
      %s51 = sphi 0, %s49
      %s52 = sphi 0, %s51
      %s66 = sphi 0, %s52
      %s70 = sphi 0, %s70
      %s72 = sphi 0, %s70
      %s73 = sphi 0, %s72
      %s87 = sphi 0, %s73
      %s93 = sphi 0, %s95
      %s96 = sphi 0, %s93
      %s97 = sphi 0, %s96
      %s113 = sphi 0, %s97
    $region4: #{tpu_custom_call.1} parent=1 // loop_header_branch
      %18 = sbr.rel (%p16) target = $region8
    $region5: #{tpu_custom_call.1} parent=1 // loop_body
      %s20 = ssub.s32 %s15, 1
      %s21 = ssub.s32 %s15, 2
      %s22 = sadd.s32 %s15, 1
      %s23 = ssub.s32 %s15, %s22
      %p24 = scmp.eq.s32.totalorder %s23, 0
      %s26 = sadd.s32 %s25, 1
      %s27 = scalar_select %p24, %s25, %s26
      %p30 = pneg %p24
      %p31 = scmp.eq.s32.totalorder %s15, 1
      %p32 = por %p30, %p31
      %p33 = scmp.ne.s32.totalorder %s25, %s28
      %p34 = scmp.eq.s32.totalorder %s15, 0
      %p35 = por %p33, %p34
      %p36 = scmp.ne.s32.totalorder %s25, %s28
      %p37 = scmp.eq.s32.totalorder %s20, 1
      %p38 = por %p36, %p37
      %p39 = scmp.ne.s32.totalorder %s28, %s29
      %p40 = scmp.eq.s32.totalorder %s20, 0
      %p41 = por %p39, %p40
      %p42 = scmp.ne.s32.totalorder %s28, %s29
      %p43 = scmp.eq.s32.totalorder %s21, 1
      %p44 = por %p42, %p43
      %p46 = scmp.ne.s32.totalorder %s29, %s45
      %p47 = scmp.eq.s32.totalorder %s21, 0
      %p48 = por %p46, %p47
      %s50 = sadd.s32 %s49, 1
      %p53 = scmp.eq.s32.totalorder %s15, 1
      %p54 = scmp.ne.s32.totalorder %s49, %s51
      %p55 = scmp.eq.s32.totalorder %s15, 0
      %p56 = por %p54, %p55
      %p57 = scmp.ne.s32.totalorder %s49, %s51
      %p58 = scmp.eq.s32.totalorder %s20, 1
      %p59 = por %p57, %p58
      %p60 = scmp.ne.s32.totalorder %s51, %s52
      %p61 = scmp.eq.s32.totalorder %s20, 0
      %p62 = por %p60, %p61
      %p63 = scmp.ne.s32.totalorder %s51, %s52
      %p64 = scmp.eq.s32.totalorder %s21, 1
      %p65 = por %p63, %p64
      %p67 = scmp.ne.s32.totalorder %s52, %s66
      %p68 = scmp.eq.s32.totalorder %s21, 0
      %p69 = por %p67, %p68
      %s71 = sadd.s32 %s70, 1
      %p74 = scmp.eq.s32.totalorder %s15, 1
      %p75 = scmp.ne.s32.totalorder %s70, %s72
      %p76 = scmp.eq.s32.totalorder %s15, 0
      %p77 = por %p75, %p76
      %p78 = scmp.ne.s32.totalorder %s70, %s72
      %p79 = scmp.eq.s32.totalorder %s20, 1
      %p80 = por %p78, %p79
      %p81 = scmp.ne.s32.totalorder %s72, %s73
      %p82 = scmp.eq.s32.totalorder %s20, 0
      %p83 = por %p81, %p82
      %p84 = scmp.ne.s32.totalorder %s72, %s73
      %p85 = scmp.eq.s32.totalorder %s21, 1
      %p86 = por %p84, %p85
      %p88 = scmp.ne.s32.totalorder %s73, %s87
      %p89 = scmp.eq.s32.totalorder %s21, 0
      %p90 = por %p88, %p89
      %s91 = ssub.s32 %s15, %s22
      %p92 = scmp.eq.s32.totalorder %s91, 0
      %s94 = sadd.s32 %s93, 1
      %s95 = scalar_select %p92, %s93, %s94
      %p98 = pneg %p92
      %p99 = scmp.eq.s32.totalorder %s15, 1
      %p100 = por %p98, %p99
      %p101 = scmp.ne.s32.totalorder %s93, %s96
      %p102 = scmp.eq.s32.totalorder %s15, 0
      %p103 = por %p101, %p102
      %p104 = scmp.ne.s32.totalorder %s93, %s96
      %p105 = scmp.eq.s32.totalorder %s20, 1
      %p106 = por %p104, %p105
      %p107 = scmp.ne.s32.totalorder %s96, %s97
      %p108 = scmp.eq.s32.totalorder %s20, 0
      %p109 = por %p107, %p108
      %p110 = scmp.ne.s32.totalorder %s96, %s97
      %p111 = scmp.eq.s32.totalorder %s21, 1
      %p112 = por %p110, %p111
      %p114 = scmp.ne.s32.totalorder %s97, %s113
      %p115 = scmp.eq.s32.totalorder %s21, 0
      %p116 = por %p114, %p115
      %p117 = scmp.le.s32.totalorder 1, %s15
      %p118 = scmp.lt.s32.totalorder %s15, 3
      %p119 = pnand %p117, %p118
      %p120 = pneg %p119
      // Predicated region
      $region9: #{tpu_custom_call.1} parent=5 // pred_check
        _
      $region10: #{tpu_custom_call.1} parent=5 // pred_check_branch
        %122 = sbr.rel (%p119) target = $region12
      $region11: #{tpu_custom_call.1} parent=5 // pred_region
        %s123 = ssub.s32 %s15, 1
        // Predicated region
        $region13: #{tpu_custom_call.1} parent=11 // pred_check
          %p124 = pneg %p62
        $region14: #{tpu_custom_call.1} parent=11 // pred_check_branch
          %126 = sbr.rel (%p124) target = $region16
        $region15: #{tpu_custom_call.1} parent=11 // pred_region
          _
        $region16: #{tpu_custom_call.1} parent=11 // pred_fallthru
          _
        // Predicated region
        $region17: #{tpu_custom_call.1} parent=11 // pred_check
          %p127 = pneg %p83
        $region18: #{tpu_custom_call.1} parent=11 // pred_check_branch
          %129 = sbr.rel (%p127) target = $region20
        $region19: #{tpu_custom_call.1} parent=11 // pred_region
          _
        $region20: #{tpu_custom_call.1} parent=11 // pred_fallthru
          _
      $region12: #{tpu_custom_call.1} parent=5 // pred_fallthru
        _
      %p130 = scmp.lt.s32.totalorder %s15, 2
      // Predicated region
      $region21: #{tpu_custom_call.1} parent=5 // pred_check
        %p131 = pneg %p130
      $region22: #{tpu_custom_call.1} parent=5 // pred_check_branch
        %133 = sbr.rel (%p131) target = $region24
      $region23: #{tpu_custom_call.1} parent=5 // pred_region
        // Predicated region
        $region25: #{tpu_custom_call.1} parent=23 // pred_check
          %p134 = pneg %p35
        $region26: #{tpu_custom_call.1} parent=23 // pred_check_branch
          %136 = sbr.rel (%p134) target = $region28
        $region27: #{tpu_custom_call.1} parent=23 // pred_region
          %s137 = sand.u32 %s25, 1
          %s138 = scalar_lea.sflag [#allocation3], %s137
          %s139 = sand.u32 %s25, 1
          %s140 = smul.addr %s139, 256
          %s141 = scalar_lea.vmem [#allocation2], %s140
          %143 = vsyncadd %s138, 0
          %s144 = smul.addr %s15, 32
          %s145 = smul.addr %s144, 8
          %s146 = scalar_lea.hbm %s0, %s145
          %s147 = sshll.u32 %s146, 4
          %s148 = int_to_ptr.hbm [resolvable:$true] %s147
          %s149 = sshll.u32 %s141, 4
          %s150 = int_to_ptr.vmem [resolvable:$true] %s149
          %155 = dma.hbm_to_vmem [thread:$0]  %s148, 4096, %s150, %s138, 256, 256, 16
        $region28: #{tpu_custom_call.1} parent=23 // pred_fallthru
          _
      $region24: #{tpu_custom_call.1} parent=5 // pred_fallthru
        _
      %p156 = scmp.le.s32.totalorder 1, %s15
      %p157 = scmp.lt.s32.totalorder %s15, 3
      %p158 = pnand %p156, %p157
      %p159 = pneg %p158
      // Predicated region
      $region29: #{tpu_custom_call.1} parent=5 // pred_check
        _
      $region30: #{tpu_custom_call.1} parent=5 // pred_check_branch
        %161 = sbr.rel (%p158) target = $region32
      $region31: #{tpu_custom_call.1} parent=5 // pred_region
        %s162 = ssub.s32 %s15, 1
        %s163 = sand.u32 %s28, 1
        %s164 = scalar_lea.sflag [#allocation3], %s163
        %s165 = sand.u32 %s28, 1
        %s166 = smul.addr %s165, 256
        %s167 = scalar_lea.vmem [#allocation2], %s166
        // Predicated region
        $region33: #{tpu_custom_call.1} parent=31 // pred_check
          %p168 = pneg %p41
        $region34: #{tpu_custom_call.1} parent=31 // pred_check_branch
          %170 = sbr.rel (%p168) target = $region36
        $region35: #{tpu_custom_call.1} parent=31 // pred_region
          %172 = dma.done %s164, 4096
        $region36: #{tpu_custom_call.1} parent=31 // pred_fallthru
          _
        %s173 = sand.u32 %s28, 1
        %s174 = scalar_lea.sflag [#allocation3], %s173
        %s175 = sand.u32 %s28, 1
        %s176 = smul.addr %s175, 256
        %s177 = scalar_lea.vmem [#allocation2], %s176
        %p178 = pneg %p41
        %p179 = pneg %p38
        %p180 = pneg %p62
        %p181 = pneg %p59
        %p182 = pneg %p83
        %p183 = pneg %p80
        %p184 = pneg %p109
        %p185 = pneg %p106
        %s186 = sand.u32 %s96, 1
        %s187 = scalar_lea.sflag [#allocation4], %s186
        %s188 = sand.u32 %s96, 1
        %s189 = smul.addr %s188, 256
        %s190 = scalar_lea.vmem [#allocation5], %s189
        %v191 = vld [vmem:[%s167] sm:$0xff]
        %v192 = vld [vmem:[%s167 + $0x8] sm:$0xff]
        %v193 = vld [vmem:[%s167 + $0x10] sm:$0xff]
        %v194 = vld [vmem:[%s167 + $0x18] sm:$0xff]
        %v195 = vld [vmem:[%s167 + $0x20] sm:$0xff]
        %v196 = vld [vmem:[%s167 + $0x28] sm:$0xff]
        %v197 = vld [vmem:[%s167 + $0x30] sm:$0xff]
        %v198 = vld [vmem:[%s167 + $0x38] sm:$0xff]
        %v199 = vld [vmem:[%s167 + $0x40] sm:$0xff]
        %v200 = vld [vmem:[%s167 + $0x48] sm:$0xff]
        %v201 = vld [vmem:[%s167 + $0x50] sm:$0xff]
        %v202 = vld [vmem:[%s167 + $0x58] sm:$0xff]
        %v203 = vld [vmem:[%s167 + $0x60] sm:$0xff]
        %v204 = vld [vmem:[%s167 + $0x68] sm:$0xff]
        %v205 = vld [vmem:[%s167 + $0x70] sm:$0xff]
        %v206 = vld [vmem:[%s167 + $0x78] sm:$0xff]
        %v207 = vld [vmem:[%s167 + $0x80] sm:$0xff]
        %v208 = vld [vmem:[%s167 + $0x88] sm:$0xff]
        %v209 = vld [vmem:[%s167 + $0x90] sm:$0xff]
        %v210 = vld [vmem:[%s167 + $0x98] sm:$0xff]
        %v211 = vld [vmem:[%s167 + $0xa0] sm:$0xff]
        %v212 = vld [vmem:[%s167 + $0xa8] sm:$0xff]
        %v213 = vld [vmem:[%s167 + $0xb0] sm:$0xff]
        %v214 = vld [vmem:[%s167 + $0xb8] sm:$0xff]
        %v215 = vld [vmem:[%s167 + $0xc0] sm:$0xff]
        %v216 = vld [vmem:[%s167 + $0xc8] sm:$0xff]
        %v217 = vld [vmem:[%s167 + $0xd0] sm:$0xff]
        %v218 = vld [vmem:[%s167 + $0xd8] sm:$0xff]
        %v219 = vld [vmem:[%s167 + $0xe0] sm:$0xff]
        %v220 = vld [vmem:[%s167 + $0xe8] sm:$0xff]
        %v221 = vld [vmem:[%s167 + $0xf0] sm:$0xff]
        %v222 = vld [vmem:[%s167 + $0xf8] sm:$0xff]
        %v223 = vadd.f32 %v191, %v192
        %224 = vadd.xlane.f32.xlu0 %v223
        %v225 = vpop.xlane.xlu0 %224
        %v226 = vadd.f32 %v193, %v194
        %227 = vadd.xlane.f32.xlu0 %v226
        %v228 = vpop.xlane.xlu0 %227
        %v229 = vadd.f32 %v195, %v196
        %230 = vadd.xlane.f32.xlu0 %v229
        %v231 = vpop.xlane.xlu0 %230
        %v232 = vadd.f32 %v197, %v198
        %233 = vadd.xlane.f32.xlu0 %v232
        %v234 = vpop.xlane.xlu0 %233
        %v235 = vadd.f32 %v199, %v200
        %236 = vadd.xlane.f32.xlu0 %v235
        %v237 = vpop.xlane.xlu0 %236
        %v238 = vadd.f32 %v201, %v202
        %239 = vadd.xlane.f32.xlu0 %v238
        %v240 = vpop.xlane.xlu0 %239
        %v241 = vadd.f32 %v203, %v204
        %242 = vadd.xlane.f32.xlu0 %v241
        %v243 = vpop.xlane.xlu0 %242
        %v244 = vadd.f32 %v205, %v206
        %245 = vadd.xlane.f32.xlu0 %v244
        %v246 = vpop.xlane.xlu0 %245
        %v247 = vadd.f32 %v207, %v208
        %248 = vadd.xlane.f32.xlu0 %v247
        %v249 = vpop.xlane.xlu0 %248
        %v250 = vadd.f32 %v209, %v210
        %251 = vadd.xlane.f32.xlu0 %v250
        %v252 = vpop.xlane.xlu0 %251
        %v253 = vadd.f32 %v211, %v212
        %254 = vadd.xlane.f32.xlu0 %v253
        %v255 = vpop.xlane.xlu0 %254
        %v256 = vadd.f32 %v213, %v214
        %257 = vadd.xlane.f32.xlu0 %v256
        %v258 = vpop.xlane.xlu0 %257
        %v259 = vadd.f32 %v215, %v216
        %260 = vadd.xlane.f32.xlu0 %v259
        %v261 = vpop.xlane.xlu0 %260
        %v262 = vadd.f32 %v217, %v218
        %263 = vadd.xlane.f32.xlu0 %v262
        %v264 = vpop.xlane.xlu0 %263
        %v265 = vadd.f32 %v219, %v220
        %266 = vadd.xlane.f32.xlu0 %v265
        %v267 = vpop.xlane.xlu0 %266
        %v268 = vadd.f32 %v221, %v222
        %269 = vadd.xlane.f32.xlu0 %v268
        %v270 = vpop.xlane.xlu0 %269
        %v271 = vmul.f32 %v225, 0.00390625
        %v272 = vmul.f32 %v228, 0.00390625
        %v273 = vmul.f32 %v231, 0.00390625
        %v274 = vmul.f32 %v234, 0.00390625
        %v275 = vmul.f32 %v237, 0.00390625
        %v276 = vmul.f32 %v240, 0.00390625
        %v277 = vmul.f32 %v243, 0.00390625
        %v278 = vmul.f32 %v246, 0.00390625
        %v279 = vmul.f32 %v249, 0.00390625
        %v280 = vmul.f32 %v252, 0.00390625
        %v281 = vmul.f32 %v255, 0.00390625
        %v282 = vmul.f32 %v258, 0.00390625
        %v283 = vmul.f32 %v261, 0.00390625
        %v284 = vmul.f32 %v264, 0.00390625
        %v285 = vmul.f32 %v267, 0.00390625
        %v286 = vmul.f32 %v270, 0.00390625
        %v287 = vld [vmem:[%s1] sm:$0xff]
        %288 = vmatpush.msra.mxu0 %v286
        %289 = vmatpush.msra.mxu0 %v285
        %290 = vmatpush.msra.mxu0 %v284
        %291 = vmatpush.msra.mxu0 %v283
        %292 = vmatpush.msra.mxu0 %v282
        %293 = vmatpush.msra.mxu0 %v281
        %294 = vmatpush.msra.mxu0 %v280
        %295 = vmatpush.msra.mxu0 %v279
        %296 = vmatpush.msra.mxu0 %v278
        %297 = vmatpush.msra.mxu0 %v277
        %298 = vmatpush.msra.mxu0 %v276
        %299 = vmatpush.msra.mxu0 %v275
        %300 = vmatpush.msra.mxu0 %v274
        %301 = vmatpush.msra.mxu0 %v273
        %302 = vmatpush.msra.mxu0 %v272
        %303 = vmatpush.msra.mxu0 %v271
        %304 = vmatmul.f32.gmra.mxu0 %v287
        %v305 = vpop.f32.mrf.mxu0
        %v306 = vadd.f32 0.0, %v305
        %307 = vdwg.mxu0
        %v308 = vmax.f32 %v306, 0.0
        %v309 = vld [vmem:[%s2] sm:$0xff]
        %v310 = vld [vmem:[%s2 + $0x8] sm:$0xff]
        %v311 = vld [vmem:[%s2 + $0x10] sm:$0xff]
        %v312 = vld [vmem:[%s2 + $0x18] sm:$0xff]
        %v313 = vld [vmem:[%s2 + $0x20] sm:$0xff]
        %v314 = vld [vmem:[%s2 + $0x28] sm:$0xff]
        %v315 = vld [vmem:[%s2 + $0x30] sm:$0xff]
        %v316 = vld [vmem:[%s2 + $0x38] sm:$0xff]
        %v317 = vld [vmem:[%s2 + $0x40] sm:$0xff]
        %v318 = vld [vmem:[%s2 + $0x48] sm:$0xff]
        %v319 = vld [vmem:[%s2 + $0x50] sm:$0xff]
        %v320 = vld [vmem:[%s2 + $0x58] sm:$0xff]
        %v321 = vld [vmem:[%s2 + $0x60] sm:$0xff]
        %v322 = vld [vmem:[%s2 + $0x68] sm:$0xff]
        %v323 = vld [vmem:[%s2 + $0x70] sm:$0xff]
        %v324 = vld [vmem:[%s2 + $0x78] sm:$0xff]
        %vm325 = vcmask 64512
        %v327 = vsel %vm325, %v309, 0
        %v330 = vsel %vm325, %v310, 0
        %v333 = vsel %vm325, %v311, 0
        %v336 = vsel %vm325, %v312, 0
        %v339 = vsel %vm325, %v313, 0
        %v342 = vsel %vm325, %v314, 0
        %v345 = vsel %vm325, %v315, 0
        %v348 = vsel %vm325, %v316, 0
        %v351 = vsel %vm325, %v317, 0
        %v354 = vsel %vm325, %v318, 0
        %v357 = vsel %vm325, %v319, 0
        %v360 = vsel %vm325, %v320, 0
        %v363 = vsel %vm325, %v321, 0
        %v366 = vsel %vm325, %v322, 0
        %v369 = vsel %vm325, %v323, 0
        %v372 = vsel %vm325, %v324, 0
        %374 = vmatpush.msra.mxu0 0.0
        %375 = vmatpush.msra.mxu0 0.0
        %376 = vmatpush.msra.mxu0 0.0
        %377 = vmatpush.msra.mxu0 0.0
        %378 = vmatpush.msra.mxu0 0.0
        %379 = vmatpush.msra.mxu0 0.0
        %380 = vmatpush.msra.mxu0 0.0
        %381 = vmatpush.msra.mxu0 0.0
        %382 = vmatpush.msra.mxu0 0.0
        %383 = vmatpush.msra.mxu0 0.0
        %384 = vmatpush.msra.mxu0 0.0
        %385 = vmatpush.msra.mxu0 0.0
        %386 = vmatpush.msra.mxu0 0.0
        %387 = vmatpush.msra.mxu0 0.0
        %388 = vmatpush.msra.mxu0 0.0
        %389 = vmatpush.msra.mxu0 %v308
        %390 = vmatmul.f32.gmra.mxu0 %v327
        %v391 = vpop.f32.mrf.mxu0
        %v392 = vadd.f32 0.0, %v391
        %393 = vmatmul.f32.gmra.mxu0 %v330
        %v394 = vpop.f32.mrf.mxu0
        %v395 = vadd.f32 0.0, %v394
        %396 = vmatmul.f32.gmra.mxu0 %v333
        %v397 = vpop.f32.mrf.mxu0
        %v398 = vadd.f32 0.0, %v397
        %399 = vmatmul.f32.gmra.mxu0 %v336
        %v400 = vpop.f32.mrf.mxu0
        %v401 = vadd.f32 0.0, %v400
        %402 = vmatmul.f32.gmra.mxu0 %v339
        %v403 = vpop.f32.mrf.mxu0
        %v404 = vadd.f32 0.0, %v403
        %405 = vmatmul.f32.gmra.mxu0 %v342
        %v406 = vpop.f32.mrf.mxu0
        %v407 = vadd.f32 0.0, %v406
        %408 = vmatmul.f32.gmra.mxu0 %v345
        %v409 = vpop.f32.mrf.mxu0
        %v410 = vadd.f32 0.0, %v409
        %411 = vmatmul.f32.gmra.mxu0 %v348
        %v412 = vpop.f32.mrf.mxu0
        %v413 = vadd.f32 0.0, %v412
        %414 = vmatmul.f32.gmra.mxu0 %v351
        %v415 = vpop.f32.mrf.mxu0
        %v416 = vadd.f32 0.0, %v415
        %417 = vmatmul.f32.gmra.mxu0 %v354
        %v418 = vpop.f32.mrf.mxu0
        %v419 = vadd.f32 0.0, %v418
        %420 = vmatmul.f32.gmra.mxu0 %v357
        %v421 = vpop.f32.mrf.mxu0
        %v422 = vadd.f32 0.0, %v421
        %423 = vmatmul.f32.gmra.mxu0 %v360
        %v424 = vpop.f32.mrf.mxu0
        %v425 = vadd.f32 0.0, %v424
        %426 = vmatmul.f32.gmra.mxu0 %v363
        %v427 = vpop.f32.mrf.mxu0
        %v428 = vadd.f32 0.0, %v427
        %429 = vmatmul.f32.gmra.mxu0 %v366
        %v430 = vpop.f32.mrf.mxu0
        %v431 = vadd.f32 0.0, %v430
        %432 = vmatmul.f32.gmra.mxu0 %v369
        %v433 = vpop.f32.mrf.mxu0
        %v434 = vadd.f32 0.0, %v433
        %435 = vmatmul.f32.gmra.mxu0 %v372
        %v436 = vpop.f32.mrf.mxu0
        %v437 = vadd.f32 0.0, %v436
        %438 = vdwg.mxu0
        %v439 = vsub.f32 0.0, %v392
        %v440 = vsub.f32 0.0, %v395
        %v441 = vsub.f32 0.0, %v398
        %v442 = vsub.f32 0.0, %v401
        %v443 = vsub.f32 0.0, %v404
        %v444 = vsub.f32 0.0, %v407
        %v445 = vsub.f32 0.0, %v410
        %v446 = vsub.f32 0.0, %v413
        %v447 = vsub.f32 0.0, %v416
        %v448 = vsub.f32 0.0, %v419
        %v449 = vsub.f32 0.0, %v422
        %v450 = vsub.f32 0.0, %v425
        %v451 = vsub.f32 0.0, %v428
        %v452 = vsub.f32 0.0, %v431
        %v453 = vsub.f32 0.0, %v434
        %v454 = vsub.f32 0.0, %v437
        %v455 = vmul.f32 %v439, 1.442695
        %v456 = vpow.pop %v455
        %v457 = vmul.f32 %v440, 1.442695
        %v458 = vpow.pop %v457
        %v459 = vmul.f32 %v441, 1.442695
        %v460 = vpow.pop %v459
        %v461 = vmul.f32 %v442, 1.442695
        %v462 = vpow.pop %v461
        %v463 = vmul.f32 %v443, 1.442695
        %v464 = vpow.pop %v463
        %v465 = vmul.f32 %v444, 1.442695
        %v466 = vpow.pop %v465
        %v467 = vmul.f32 %v445, 1.442695
        %v468 = vpow.pop %v467
        %v469 = vmul.f32 %v446, 1.442695
        %v470 = vpow.pop %v469
        %v471 = vmul.f32 %v447, 1.442695
        %v472 = vpow.pop %v471
        %v473 = vmul.f32 %v448, 1.442695
        %v474 = vpow.pop %v473
        %v475 = vmul.f32 %v449, 1.442695
        %v476 = vpow.pop %v475
        %v477 = vmul.f32 %v450, 1.442695
        %v478 = vpow.pop %v477
        %v479 = vmul.f32 %v451, 1.442695
        %v480 = vpow.pop %v479
        %v481 = vmul.f32 %v452, 1.442695
        %v482 = vpow.pop %v481
        %v483 = vmul.f32 %v453, 1.442695
        %v484 = vpow.pop %v483
        %v485 = vmul.f32 %v454, 1.442695
        %v486 = vpow.pop %v485
        %v487 = vadd.f32 %v456, 1.0
        %v488 = vadd.f32 %v458, 1.0
        %v489 = vadd.f32 %v460, 1.0
        %v490 = vadd.f32 %v462, 1.0
        %v491 = vadd.f32 %v464, 1.0
        %v492 = vadd.f32 %v466, 1.0
        %v493 = vadd.f32 %v468, 1.0
        %v494 = vadd.f32 %v470, 1.0
        %v495 = vadd.f32 %v472, 1.0
        %v496 = vadd.f32 %v474, 1.0
        %v497 = vadd.f32 %v476, 1.0
        %v498 = vadd.f32 %v478, 1.0
        %v499 = vadd.f32 %v480, 1.0
        %v500 = vadd.f32 %v482, 1.0
        %v501 = vadd.f32 %v484, 1.0
        %v502 = vadd.f32 %v486, 1.0
        %v503 = vrcp.pop %v487
        %v504 = vmul.f32 %v487, %v503
        %v505 = vsub.f32 1.0, %v504
        %v506 = vmul.f32 %v503, %v505
        %v507 = vadd.f32 %v503, %v506
        %vm508 = vweird.f32 %v487
        %vm509 = vweird.f32 %v503
        %vm510 = vmor %vm508, %vm509
        %v511 = vsel %vm510, %v503, %v507
        %v512 = vand.u32 2147483647, %v487
        %vm513 = vcmp.eq.f32.partialorder %v512, 8.507059e+37
        %v514 = vand.u32 %v487, 2147483648
        %v515 = vor.u32 1.1754944e-38, %v514
        %v516 = vsel %vm513, %v515, %v511
        %v517 = vmul.f32 1.0, %v516
        %v518 = vrcp.pop %v488
        %v519 = vmul.f32 %v488, %v518
        %v520 = vsub.f32 1.0, %v519
        %v521 = vmul.f32 %v518, %v520
        %v522 = vadd.f32 %v518, %v521
        %vm523 = vweird.f32 %v488
        %vm524 = vweird.f32 %v518
        %vm525 = vmor %vm523, %vm524
        %v526 = vsel %vm525, %v518, %v522
        %v527 = vand.u32 2147483647, %v488
        %vm528 = vcmp.eq.f32.partialorder %v527, 8.507059e+37
        %v529 = vand.u32 %v488, 2147483648
        %v530 = vor.u32 1.1754944e-38, %v529
        %v531 = vsel %vm528, %v530, %v526
        %v532 = vmul.f32 1.0, %v531
        %v533 = vrcp.pop %v489
        %v534 = vmul.f32 %v489, %v533
        %v535 = vsub.f32 1.0, %v534
        %v536 = vmul.f32 %v533, %v535
        %v537 = vadd.f32 %v533, %v536
        %vm538 = vweird.f32 %v489
        %vm539 = vweird.f32 %v533
        %vm540 = vmor %vm538, %vm539
        %v541 = vsel %vm540, %v533, %v537
        %v542 = vand.u32 2147483647, %v489
        %vm543 = vcmp.eq.f32.partialorder %v542, 8.507059e+37
        %v544 = vand.u32 %v489, 2147483648
        %v545 = vor.u32 1.1754944e-38, %v544
        %v546 = vsel %vm543, %v545, %v541
        %v547 = vmul.f32 1.0, %v546
        %v548 = vrcp.pop %v490
        %v549 = vmul.f32 %v490, %v548
        %v550 = vsub.f32 1.0, %v549
        %v551 = vmul.f32 %v548, %v550
        %v552 = vadd.f32 %v548, %v551
        %vm553 = vweird.f32 %v490
        %vm554 = vweird.f32 %v548
        %vm555 = vmor %vm553, %vm554
        %v556 = vsel %vm555, %v548, %v552
        %v557 = vand.u32 2147483647, %v490
        %vm558 = vcmp.eq.f32.partialorder %v557, 8.507059e+37
        %v559 = vand.u32 %v490, 2147483648
        %v560 = vor.u32 1.1754944e-38, %v559
        %v561 = vsel %vm558, %v560, %v556
        %v562 = vmul.f32 1.0, %v561
        %v563 = vrcp.pop %v491
        %v564 = vmul.f32 %v491, %v563
        %v565 = vsub.f32 1.0, %v564
        %v566 = vmul.f32 %v563, %v565
        %v567 = vadd.f32 %v563, %v566
        %vm568 = vweird.f32 %v491
        %vm569 = vweird.f32 %v563
        %vm570 = vmor %vm568, %vm569
        %v571 = vsel %vm570, %v563, %v567
        %v572 = vand.u32 2147483647, %v491
        %vm573 = vcmp.eq.f32.partialorder %v572, 8.507059e+37
        %v574 = vand.u32 %v491, 2147483648
        %v575 = vor.u32 1.1754944e-38, %v574
        %v576 = vsel %vm573, %v575, %v571
        %v577 = vmul.f32 1.0, %v576
        %v578 = vrcp.pop %v492
        %v579 = vmul.f32 %v492, %v578
        %v580 = vsub.f32 1.0, %v579
        %v581 = vmul.f32 %v578, %v580
        %v582 = vadd.f32 %v578, %v581
        %vm583 = vweird.f32 %v492
        %vm584 = vweird.f32 %v578
        %vm585 = vmor %vm583, %vm584
        %v586 = vsel %vm585, %v578, %v582
        %v587 = vand.u32 2147483647, %v492
        %vm588 = vcmp.eq.f32.partialorder %v587, 8.507059e+37
        %v589 = vand.u32 %v492, 2147483648
        %v590 = vor.u32 1.1754944e-38, %v589
        %v591 = vsel %vm588, %v590, %v586
        %v592 = vmul.f32 1.0, %v591
        %v593 = vrcp.pop %v493
        %v594 = vmul.f32 %v493, %v593
        %v595 = vsub.f32 1.0, %v594
        %v596 = vmul.f32 %v593, %v595
        %v597 = vadd.f32 %v593, %v596
        %vm598 = vweird.f32 %v493
        %vm599 = vweird.f32 %v593
        %vm600 = vmor %vm598, %vm599
        %v601 = vsel %vm600, %v593, %v597
        %v602 = vand.u32 2147483647, %v493
        %vm603 = vcmp.eq.f32.partialorder %v602, 8.507059e+37
        %v604 = vand.u32 %v493, 2147483648
        %v605 = vor.u32 1.1754944e-38, %v604
        %v606 = vsel %vm603, %v605, %v601
        %v607 = vmul.f32 1.0, %v606
        %v608 = vrcp.pop %v494
        %v609 = vmul.f32 %v494, %v608
        %v610 = vsub.f32 1.0, %v609
        %v611 = vmul.f32 %v608, %v610
        %v612 = vadd.f32 %v608, %v611
        %vm613 = vweird.f32 %v494
        %vm614 = vweird.f32 %v608
        %vm615 = vmor %vm613, %vm614
        %v616 = vsel %vm615, %v608, %v612
        %v617 = vand.u32 2147483647, %v494
        %vm618 = vcmp.eq.f32.partialorder %v617, 8.507059e+37
        %v619 = vand.u32 %v494, 2147483648
        %v620 = vor.u32 1.1754944e-38, %v619
        %v621 = vsel %vm618, %v620, %v616
        %v622 = vmul.f32 1.0, %v621
        %v623 = vrcp.pop %v495
        %v624 = vmul.f32 %v495, %v623
        %v625 = vsub.f32 1.0, %v624
        %v626 = vmul.f32 %v623, %v625
        %v627 = vadd.f32 %v623, %v626
        %vm628 = vweird.f32 %v495
        %vm629 = vweird.f32 %v623
        %vm630 = vmor %vm628, %vm629
        %v631 = vsel %vm630, %v623, %v627
        %v632 = vand.u32 2147483647, %v495
        %vm633 = vcmp.eq.f32.partialorder %v632, 8.507059e+37
        %v634 = vand.u32 %v495, 2147483648
        %v635 = vor.u32 1.1754944e-38, %v634
        %v636 = vsel %vm633, %v635, %v631
        %v637 = vmul.f32 1.0, %v636
        %v638 = vrcp.pop %v496
        %v639 = vmul.f32 %v496, %v638
        %v640 = vsub.f32 1.0, %v639
        %v641 = vmul.f32 %v638, %v640
        %v642 = vadd.f32 %v638, %v641
        %vm643 = vweird.f32 %v496
        %vm644 = vweird.f32 %v638
        %vm645 = vmor %vm643, %vm644
        %v646 = vsel %vm645, %v638, %v642
        %v647 = vand.u32 2147483647, %v496
        %vm648 = vcmp.eq.f32.partialorder %v647, 8.507059e+37
        %v649 = vand.u32 %v496, 2147483648
        %v650 = vor.u32 1.1754944e-38, %v649
        %v651 = vsel %vm648, %v650, %v646
        %v652 = vmul.f32 1.0, %v651
        %v653 = vrcp.pop %v497
        %v654 = vmul.f32 %v497, %v653
        %v655 = vsub.f32 1.0, %v654
        %v656 = vmul.f32 %v653, %v655
        %v657 = vadd.f32 %v653, %v656
        %vm658 = vweird.f32 %v497
        %vm659 = vweird.f32 %v653
        %vm660 = vmor %vm658, %vm659
        %v661 = vsel %vm660, %v653, %v657
        %v662 = vand.u32 2147483647, %v497
        %vm663 = vcmp.eq.f32.partialorder %v662, 8.507059e+37
        %v664 = vand.u32 %v497, 2147483648
        %v665 = vor.u32 1.1754944e-38, %v664
        %v666 = vsel %vm663, %v665, %v661
        %v667 = vmul.f32 1.0, %v666
        %v668 = vrcp.pop %v498
        %v669 = vmul.f32 %v498, %v668
        %v670 = vsub.f32 1.0, %v669
        %v671 = vmul.f32 %v668, %v670
        %v672 = vadd.f32 %v668, %v671
        %vm673 = vweird.f32 %v498
        %vm674 = vweird.f32 %v668
        %vm675 = vmor %vm673, %vm674
        %v676 = vsel %vm675, %v668, %v672
        %v677 = vand.u32 2147483647, %v498
        %vm678 = vcmp.eq.f32.partialorder %v677, 8.507059e+37
        %v679 = vand.u32 %v498, 2147483648
        %v680 = vor.u32 1.1754944e-38, %v679
        %v681 = vsel %vm678, %v680, %v676
        %v682 = vmul.f32 1.0, %v681
        %v683 = vrcp.pop %v499
        %v684 = vmul.f32 %v499, %v683
        %v685 = vsub.f32 1.0, %v684
        %v686 = vmul.f32 %v683, %v685
        %v687 = vadd.f32 %v683, %v686
        %vm688 = vweird.f32 %v499
        %vm689 = vweird.f32 %v683
        %vm690 = vmor %vm688, %vm689
        %v691 = vsel %vm690, %v683, %v687
        %v692 = vand.u32 2147483647, %v499
        %vm693 = vcmp.eq.f32.partialorder %v692, 8.507059e+37
        %v694 = vand.u32 %v499, 2147483648
        %v695 = vor.u32 1.1754944e-38, %v694
        %v696 = vsel %vm693, %v695, %v691
        %v697 = vmul.f32 1.0, %v696
        %v698 = vrcp.pop %v500
        %v699 = vmul.f32 %v500, %v698
        %v700 = vsub.f32 1.0, %v699
        %v701 = vmul.f32 %v698, %v700
        %v702 = vadd.f32 %v698, %v701
        %vm703 = vweird.f32 %v500
        %vm704 = vweird.f32 %v698
        %vm705 = vmor %vm703, %vm704
        %v706 = vsel %vm705, %v698, %v702
        %v707 = vand.u32 2147483647, %v500
        %vm708 = vcmp.eq.f32.partialorder %v707, 8.507059e+37
        %v709 = vand.u32 %v500, 2147483648
        %v710 = vor.u32 1.1754944e-38, %v709
        %v711 = vsel %vm708, %v710, %v706
        %v712 = vmul.f32 1.0, %v711
        %v713 = vrcp.pop %v501
        %v714 = vmul.f32 %v501, %v713
        %v715 = vsub.f32 1.0, %v714
        %v716 = vmul.f32 %v713, %v715
        %v717 = vadd.f32 %v713, %v716
        %vm718 = vweird.f32 %v501
        %vm719 = vweird.f32 %v713
        %vm720 = vmor %vm718, %vm719
        %v721 = vsel %vm720, %v713, %v717
        %v722 = vand.u32 2147483647, %v501
        %vm723 = vcmp.eq.f32.partialorder %v722, 8.507059e+37
        %v724 = vand.u32 %v501, 2147483648
        %v725 = vor.u32 1.1754944e-38, %v724
        %v726 = vsel %vm723, %v725, %v721
        %v727 = vmul.f32 1.0, %v726
        %v728 = vrcp.pop %v502
        %v729 = vmul.f32 %v502, %v728
        %v730 = vsub.f32 1.0, %v729
        %v731 = vmul.f32 %v728, %v730
        %v732 = vadd.f32 %v728, %v731
        %vm733 = vweird.f32 %v502
        %vm734 = vweird.f32 %v728
        %vm735 = vmor %vm733, %vm734
        %v736 = vsel %vm735, %v728, %v732
        %v737 = vand.u32 2147483647, %v502
        %vm738 = vcmp.eq.f32.partialorder %v737, 8.507059e+37
        %v739 = vand.u32 %v502, 2147483648
        %v740 = vor.u32 1.1754944e-38, %v739
        %v741 = vsel %vm738, %v740, %v736
        %v742 = vmul.f32 1.0, %v741
        %744 = vset.pattern.permute.xlu0 0
        %745 = vperm.xlu0 %744, %v517
        %v746 = vpop.permute.xlu0 %745
        %749 = vset.pattern.permute.xlu0 0
        %750 = vperm.xlu0 %749, %v532
        %v751 = vpop.permute.xlu0 %750
        %754 = vset.pattern.permute.xlu0 0
        %755 = vperm.xlu0 %754, %v547
        %v756 = vpop.permute.xlu0 %755
        %759 = vset.pattern.permute.xlu0 0
        %760 = vperm.xlu0 %759, %v562
        %v761 = vpop.permute.xlu0 %760
        %764 = vset.pattern.permute.xlu0 0
        %765 = vperm.xlu0 %764, %v577
        %v766 = vpop.permute.xlu0 %765
        %769 = vset.pattern.permute.xlu0 0
        %770 = vperm.xlu0 %769, %v592
        %v771 = vpop.permute.xlu0 %770
        %774 = vset.pattern.permute.xlu0 0
        %775 = vperm.xlu0 %774, %v607
        %v776 = vpop.permute.xlu0 %775
        %779 = vset.pattern.permute.xlu0 0
        %780 = vperm.xlu0 %779, %v622
        %v781 = vpop.permute.xlu0 %780
        %784 = vset.pattern.permute.xlu0 0
        %785 = vperm.xlu0 %784, %v637
        %v786 = vpop.permute.xlu0 %785
        %789 = vset.pattern.permute.xlu0 0
        %790 = vperm.xlu0 %789, %v652
        %v791 = vpop.permute.xlu0 %790
        %794 = vset.pattern.permute.xlu0 0
        %795 = vperm.xlu0 %794, %v667
        %v796 = vpop.permute.xlu0 %795
        %799 = vset.pattern.permute.xlu0 0
        %800 = vperm.xlu0 %799, %v682
        %v801 = vpop.permute.xlu0 %800
        %804 = vset.pattern.permute.xlu0 0
        %805 = vperm.xlu0 %804, %v697
        %v806 = vpop.permute.xlu0 %805
        %809 = vset.pattern.permute.xlu0 0
        %810 = vperm.xlu0 %809, %v712
        %v811 = vpop.permute.xlu0 %810
        %814 = vset.pattern.permute.xlu0 0
        %815 = vperm.xlu0 %814, %v727
        %v816 = vpop.permute.xlu0 %815
        %819 = vset.pattern.permute.xlu0 0
        %820 = vperm.xlu0 %819, %v742
        %v821 = vpop.permute.xlu0 %820
        %v823 = vmul.f32 %v191, %v746
        %v824 = vmul.f32 %v192, %v746
        %v825 = vmul.f32 %v193, %v751
        %v826 = vmul.f32 %v194, %v751
        %v827 = vmul.f32 %v195, %v756
        %v828 = vmul.f32 %v196, %v756
        %v829 = vmul.f32 %v197, %v761
        %v830 = vmul.f32 %v198, %v761
        %v831 = vmul.f32 %v199, %v766
        %v832 = vmul.f32 %v200, %v766
        %v833 = vmul.f32 %v201, %v771
        %v834 = vmul.f32 %v202, %v771
        %v835 = vmul.f32 %v203, %v776
        %v836 = vmul.f32 %v204, %v776
        %v837 = vmul.f32 %v205, %v781
        %v838 = vmul.f32 %v206, %v781
        %v839 = vmul.f32 %v207, %v786
        %v840 = vmul.f32 %v208, %v786
        %v841 = vmul.f32 %v209, %v791
        %v842 = vmul.f32 %v210, %v791
        %v843 = vmul.f32 %v211, %v796
        %v844 = vmul.f32 %v212, %v796
        %v845 = vmul.f32 %v213, %v801
        %v846 = vmul.f32 %v214, %v801
        %v847 = vmul.f32 %v215, %v806
        %v848 = vmul.f32 %v216, %v806
        %v849 = vmul.f32 %v217, %v811
        %v850 = vmul.f32 %v218, %v811
        %v851 = vmul.f32 %v219, %v816
        %v852 = vmul.f32 %v220, %v816
        %v853 = vmul.f32 %v221, %v821
        %v854 = vmul.f32 %v222, %v821
        %855 = vst [vmem:[%s190] sm:$0xff] %v823
        %856 = vst [vmem:[%s190 + $0x8] sm:$0xff] %v824
        %857 = vst [vmem:[%s190 + $0x10] sm:$0xff] %v825
        %858 = vst [vmem:[%s190 + $0x18] sm:$0xff] %v826
        %859 = vst [vmem:[%s190 + $0x20] sm:$0xff] %v827
        %860 = vst [vmem:[%s190 + $0x28] sm:$0xff] %v828
        %861 = vst [vmem:[%s190 + $0x30] sm:$0xff] %v829
        %862 = vst [vmem:[%s190 + $0x38] sm:$0xff] %v830
        %863 = vst [vmem:[%s190 + $0x40] sm:$0xff] %v831
        %864 = vst [vmem:[%s190 + $0x48] sm:$0xff] %v832
        %865 = vst [vmem:[%s190 + $0x50] sm:$0xff] %v833
        %866 = vst [vmem:[%s190 + $0x58] sm:$0xff] %v834
        %867 = vst [vmem:[%s190 + $0x60] sm:$0xff] %v835
        %868 = vst [vmem:[%s190 + $0x68] sm:$0xff] %v836
        %869 = vst [vmem:[%s190 + $0x70] sm:$0xff] %v837
        %870 = vst [vmem:[%s190 + $0x78] sm:$0xff] %v838
        %871 = vst [vmem:[%s190 + $0x80] sm:$0xff] %v839
        %872 = vst [vmem:[%s190 + $0x88] sm:$0xff] %v840
        %873 = vst [vmem:[%s190 + $0x90] sm:$0xff] %v841
        %874 = vst [vmem:[%s190 + $0x98] sm:$0xff] %v842
        %875 = vst [vmem:[%s190 + $0xa0] sm:$0xff] %v843
        %876 = vst [vmem:[%s190 + $0xa8] sm:$0xff] %v844
        %877 = vst [vmem:[%s190 + $0xb0] sm:$0xff] %v845
        %878 = vst [vmem:[%s190 + $0xb8] sm:$0xff] %v846
        %879 = vst [vmem:[%s190 + $0xc0] sm:$0xff] %v847
        %880 = vst [vmem:[%s190 + $0xc8] sm:$0xff] %v848
        %881 = vst [vmem:[%s190 + $0xd0] sm:$0xff] %v849
        %882 = vst [vmem:[%s190 + $0xd8] sm:$0xff] %v850
        %883 = vst [vmem:[%s190 + $0xe0] sm:$0xff] %v851
        %884 = vst [vmem:[%s190 + $0xe8] sm:$0xff] %v852
        %885 = vst [vmem:[%s190 + $0xf0] sm:$0xff] %v853
        %886 = vst [vmem:[%s190 + $0xf8] sm:$0xff] %v854
        %s887 = sand.u32 %s96, 1
        %s888 = scalar_lea.sflag [#allocation4], %s887
        %s889 = sand.u32 %s96, 1
        %s890 = smul.addr %s889, 256
        %s891 = scalar_lea.vmem [#allocation5], %s890
        // Predicated region
        $region37: #{tpu_custom_call.1} parent=31 // pred_check
          %p892 = pneg %p106
        $region38: #{tpu_custom_call.1} parent=31 // pred_check_branch
          %894 = sbr.rel (%p892) target = $region40
        $region39: #{tpu_custom_call.1} parent=31 // pred_region
          %896 = vsyncadd %s888, 0
          %s897 = smul.addr %s20, 32
          %s898 = smul.addr %s897, 8
          %s899 = scalar_lea.hbm %s3, %s898
          %s900 = sshll.u32 %s891, 4
          %s901 = int_to_ptr.vmem [resolvable:$true] %s900
          %s902 = sshll.u32 %s899, 4
          %s903 = int_to_ptr.hbm [resolvable:$true] %s902
          %908 = dma.vmem_to_hbm [thread:$0]  %s901, 4096, %s903, %s888, 256, 256, 16
        $region40: #{tpu_custom_call.1} parent=31 // pred_fallthru
          _
      $region32: #{tpu_custom_call.1} parent=5 // pred_fallthru
        _
      %p909 = scmp.le.s32.totalorder 2, %s15
      // Predicated region
      $region41: #{tpu_custom_call.1} parent=5 // pred_check
        %p910 = pneg %p909
      $region42: #{tpu_custom_call.1} parent=5 // pred_check_branch
        %912 = sbr.rel (%p910) target = $region44
      $region43: #{tpu_custom_call.1} parent=5 // pred_region
        %s913 = ssub.s32 %s15, 2
        // Predicated region
        $region45: #{tpu_custom_call.1} parent=43 // pred_check
          %p914 = pneg %p112
        $region46: #{tpu_custom_call.1} parent=43 // pred_check_branch
          %916 = sbr.rel (%p914) target = $region48
        $region47: #{tpu_custom_call.1} parent=43 // pred_region
          %s917 = sand.u32 %s97, 1
          %s918 = scalar_lea.sflag [#allocation4], %s917
          %s919 = sand.u32 %s97, 1
          %s920 = smul.addr %s919, 256
          %s921 = scalar_lea.vmem [#allocation5], %s920
          %923 = dma.done %s918, 4096
        $region48: #{tpu_custom_call.1} parent=43 // pred_fallthru
          _
      $region44: #{tpu_custom_call.1} parent=5 // pred_fallthru
        _
    $region6: #{tpu_custom_call.1} parent=1 // loop_footer
      %s19 = sadd.s32 1, %s15
    $region7: #{tpu_custom_call.1} parent=1 // loop_footer_branch
      %14 = sbr.rel target = $region3
    $region8: #{tpu_custom_call.1} parent=1 // loop_exit
      _
    %924 = vsyncpa [#allocation3], 1
    %s925 = scalar_lea.sflag [#allocation3], 1
    %926 = vsyncpa %s925, 1
    %927 = vsyncpa [#allocation4], 1
    %s928 = scalar_lea.sflag [#allocation4], 1
    %929 = vsyncpa %s928, 1

</llo_original>
